<compile_context>
chip_gen: v7x
topology: tpu7x:2x2x1
jax: 0.10.0
libtpu: 0.0.40
codegen_flags: <defaults>
</compile_context>

<pallas_src>
import functools

import jax
import jax.numpy as jnp
from jax.experimental import pallas as pl
from jax.experimental.pallas import tpu as pltpu


def _round_up(v, m):
    return ((v + m - 1) // m) * m


def _patch_matmul_kernel(p_ref, w_ref, o_ref):
    # p_ref: (TM, K) patch rows, w_ref: (K, E_pad) VMEM-resident weight,
    # o_ref: (TM, E_pad).  Accumulate in f32 on the MXU, cast on store.
    o_ref[...] = jnp.dot(
        p_ref[...], w_ref[...], preferred_element_type=jnp.float32
    ).astype(o_ref.dtype)


def _vmem_budget_bytes():
    """(tile budget, compiler vmem window) derived from this chip's VMEM."""
    cap = 64 * 1024 * 1024  # conservative fallback: v7x per-TensorCore VMEM
    try:
        info = pltpu.get_tpu_info()
        cap = int(getattr(info, "vmem_capacity_bytes", cap) or cap)
    except Exception:  # query unavailable -> keep conservative fallback
        pass
    # ~60% of physical VMEM for our buffers; leave headroom for compiler scratch.
    budget = min(int(cap * 0.6), 96 * 1024 * 1024)
    limit = max(budget, min(budget + 16 * 1024 * 1024, cap - 8 * 1024 * 1024))
    return budget, limit


def _choose_tile_m(M, K, E_pad, in_itemsize, out_itemsize, vmem_budget_bytes):
    """Largest power-of-two TM (multiple of 128) whose double-buffered input and
    output tiles plus the single-buffered resident weight fit the VMEM budget."""
    k_lanes = _round_up(K, 128)                               # VMEM lane padding
    weight_bytes = _round_up(K, 8) * E_pad * in_itemsize      # Buffered(1): one copy
    per_row = 2 * (k_lanes * in_itemsize + E_pad * out_itemsize)  # dbl-buffered in/out
    avail = max(vmem_budget_bytes - weight_bytes, 128 * per_row)
    m_cap = _round_up(M, 128)
    tm = 128
    while tm < m_cap and tm < 4096 and (2 * tm) * per_row <= avail:
        tm *= 2
    return tm


@functools.partial(
    jax.jit, static_argnames=("patch_size", "flatten", "compute_dtype", "out_dtype")
)
def patch_embedding_2d(x, weight, patch_size, flatten=True,
                       compute_dtype=None, out_dtype=None):
    """Forward pass equivalent to PatchEmbedding2d.forward (norm = Identity).

    x:       (B, C, H, W)
    weight:  (E, C, p, p)   PyTorch Conv2d weight layout
    returns: (B, N, E) if flatten else (B, E, Wp, Hp)   (the module applies
             transpose(-2, -1) in both branches).

    compute_dtype defaults to x.dtype (strict module parity); pass
    jnp.bfloat16 for the fast MXU path (f32 accumulation is always used).
    out_dtype defaults to compute_dtype, so bf16 compute -> bf16 output stream.
    """
    B, C, H, W = x.shape
    E = weight.shape[0]
    p = patch_size
    assert H % p == 0 and W % p == 0, "spatial dims must be divisible by patch_size"
    Hp, Wp = H // p, W // p
    N = Hp * Wp
    K = C * p * p
    M = B * N

    compute_dtype = compute_dtype or x.dtype
    out_dtype = out_dtype or compute_dtype
    in_item = jnp.dtype(compute_dtype).itemsize
    out_item = jnp.dtype(out_dtype).itemsize

    # --- glue: extract non-overlapping patches, flattened in (c, di, dj) order.
    # Under jit this reshape/transpose/astype chain fuses into a single HBM copy
    # feeding the kernel; there is no further padding copy of the (M, K) matrix.
    # TODO(synk): fusing patchify into the kernel's input DMA (x in
    #             memory_space=pl.ANY + per-(b,hi) strided copies into a (TM, K)
    #             VMEM scratch) would remove this copy too, but violates the
    #             (8,128) BlockSpec constraint for general patch sizes.
    patches = x.reshape(B, C, Hp, p, Wp, p)
    patches = patches.transpose(0, 2, 4, 1, 3, 5)            # (B, Hp, Wp, C, p, p)
    patches = patches.reshape(M, K).astype(compute_dtype)    # (M, K)

    # Conv2d weight flattened in the same (c, di, dj) order, transposed to (K, E).
    w2d = weight.reshape(E, K).T.astype(compute_dtype)       # (K, E)

    # Only the tiny weight is padded (lane-dense, unmasked output stores); the
    # big (M, K) patch matrix is used as-is (full-extent K block, ragged M edge).
    E_pad = _round_up(E, 128)
    if E_pad != E:
        w2d = jnp.pad(w2d, ((0, 0), (0, E_pad - E)))

    # --- generation-aware tile sizing --------------------------------------
    vmem_budget, vmem_limit = _vmem_budget_bytes()
    TM = _choose_tile_m(M, K, E_pad, in_item, out_item, vmem_budget)
    if TM >= M:
        if M >= 512:
            # Keep >=2 parallel grid steps so both v7x TensorCores get work.
            TM = _round_up(-(-M // 2), 128)
        else:
            TM = M          # single full-extent block (no divisibility needed)
    grid_m = pl.cdiv(M, TM)

    cost = pl.CostEstimate(
        flops=2 * M * K * E_pad,
        transcendentals=0,
        bytes_accessed=(M * K + K * E_pad) * in_item + M * E_pad * out_item,
    )

    out = pl.pallas_call(
        _patch_matmul_kernel,
        out_shape=jax.ShapeDtypeStruct((M, E_pad), out_dtype),
        grid_spec=pltpu.PrefetchScalarGridSpec(
            num_scalar_prefetch=0,
            grid=(grid_m,),
            in_specs=[
                # Patch rows: tiled along M, double-buffered/pipelined by Pallas;
                # the last block may be ragged (masked by Pallas).
                pl.BlockSpec((TM, K), lambda i: (i, 0)),
                # Projection weight: constant index_map + single buffer -> one
                # resident VMEM copy, never re-fetched.
                pl.BlockSpec((K, E_pad), lambda i: (0, 0),
                             pipeline_mode=pl.Buffered(1)),
            ],
            out_specs=pl.BlockSpec((TM, E_pad), lambda i: (i, 0)),
        ),
        compiler_params=pltpu.CompilerParams(
            # Independent M tiles: shard across TensorCores (v7x megacore).
            dimension_semantics=("parallel",),
            vmem_limit_bytes=vmem_limit,
        ),
        cost_estimate=cost,
    )(patches, w2d)

    if E_pad != E:
        out = out[:, :E]
    out = out.reshape(B, N, E)

    if flatten:
        # proj -> flatten(2) -> transpose(-2, -1)  => (B, N, E)
        return out
    # Non-flatten path still applies transpose(-2, -1) to (B, E, Hp, Wp):
    # result is (B, E, Wp, Hp), matching the PyTorch module exactly.
    return out.reshape(B, Hp, Wp, E).transpose(0, 3, 2, 1)


def xavier_uniform_conv_weight(key, embed_dim, in_chans, patch_size, dtype=jnp.float32):
    """Matches torch.nn.init.xavier_uniform_ on w.view(embed_dim, -1)."""
    fan_out = embed_dim
    fan_in = in_chans * patch_size * patch_size
    bound = (6.0 / (fan_in + fan_out)) ** 0.5
    return jax.random.uniform(
        key, (embed_dim, in_chans, patch_size, patch_size),
        minval=-bound, maxval=bound, dtype=dtype,
    )


if __name__ == "__main__":
    key = jax.random.PRNGKey(0)
    kx, kw = jax.random.split(key)

    # Small shapes consistent with the module: batch=2, in_chans=4,
    # spatial 16x16, patch_size=4 -> 16 patches, embed_dim=32.
    B, C, H, W = 2, 4, 16, 16
    patch_size = 4
    embed_dim = 32

    x = jax.random.normal(kx, (B, C, H, W), dtype=jnp.float32)
    weight = xavier_uniform_conv_weight(kw, embed_dim, C, patch_size)

    Hp, Wp = H // patch_size, W // patch_size
    N = Hp * Wp

    # Pure-JAX reference for the conv-as-matmul.
    ref_patches = x.reshape(B, C, Hp, patch_size, Wp, patch_size)
    ref_patches = ref_patches.transpose(0, 2, 4, 1, 3, 5).reshape(B, N, -1)
    ref = jnp.einsum("bnk,ek->bne", ref_patches, weight.reshape(embed_dim, -1))

    # f32 path: exact semantics of the PyTorch module.
    out = jax.block_until_ready(
        patch_embedding_2d(x, weight, patch_size=patch_size, flatten=True))
    assert out.shape == (B, N, embed_dim)
    assert jnp.allclose(out, ref, atol=1e-5, rtol=1e-5)

    # bf16 compute path (f32 MXU accumulation, bf16 output stream) -- the fast path.
    out_bf16 = jax.block_until_ready(
        patch_embedding_2d(x, weight, patch_size=patch_size, flatten=True,
                           compute_dtype=jnp.bfloat16))
    assert out_bf16.shape == (B, N, embed_dim)
    assert out_bf16.dtype == jnp.bfloat16
    assert jnp.allclose(out_bf16.astype(jnp.float32), ref, atol=5e-2, rtol=5e-2)

    # flatten=False path: (B, E, Wp, Hp), matching transpose(-2, -1) of (B, E, Hp, Wp).
    out_nf = jax.block_until_ready(
        patch_embedding_2d(x, weight, patch_size=patch_size, flatten=False))
    assert out_nf.shape == (B, embed_dim, Wp, Hp)

    print("KERNEL_OK")
</pallas_src>

<mosaic_0001>
module attributes {stable_mosaic.version = 11 : i64} {
  func.func @_patch_matmul_kernel(%arg0: i32, %arg1: memref<32x64xf32, #tpu.memory_space<vmem>>, %arg2: memref<64x128xf32, #tpu.memory_space<vmem>>, %arg3: memref<32x128xf32, #tpu.memory_space<vmem>>) attributes {dimension_semantics = [#tpu.dimension_semantics<parallel>], iteration_bounds = array<i64: 1>, scalar_prefetch = 0 : i64, scratch_operands = 0 : i64, tpu.core_type = #tpu.core_type<tc>, window_params = [{transform_indices = @transform_0, window_bounds = array<i64: 32, 64>}, {pipeline_mode = #tpu.pipeline_mode<synchronous>, transform_indices = @transform_1, window_bounds = array<i64: 64, 128>}, {transform_indices = @transform_2, window_bounds = array<i64: 32, 128>}]} {
    %c0 = arith.constant 0 : index
    %c0_0 = arith.constant 0 : index
    %0 = vector.load %arg1[%c0, %c0_0] : memref<32x64xf32, #tpu.memory_space<vmem>>, vector<32x64xf32>
    %c0_1 = arith.constant 0 : index
    %c0_2 = arith.constant 0 : index
    %1 = vector.load %arg2[%c0_1, %c0_2] : memref<64x128xf32, #tpu.memory_space<vmem>>, vector<64x128xf32>
    %cst = arith.constant dense<0.000000e+00> : vector<32x128xf32>
    %2 = tpu.matmul %0, %1, %cst {dimension_numbers = #tpu.dot_dimension_numbers<[1], [0], [0], [1], [0, 0, 1, 1], [], []>} : vector<32x64xf32>, vector<64x128xf32>, vector<32x128xf32> -> vector<32x128xf32>
    %c0_3 = arith.constant 0 : index
    %c0_4 = arith.constant 0 : index
    %3 = vector.load %arg3[%c0_3, %c0_4] : memref<32x128xf32, #tpu.memory_space<vmem>>, vector<32x128xf32>
    tpu.vector_store %arg3[%c0_3, %c0_4], %2 {strides = array<i32>} : memref<32x128xf32, #tpu.memory_space<vmem>>, vector<32x128xf32>,
    return
  }
  func.func @transform_0(%arg0: i32) -> (i32, i32) {
    %c0_i32 = arith.constant 0 : i32
    %c0_i32_0 = arith.constant 0 : i32
    return %arg0, %c0_i32 : i32, i32
  }
  func.func @transform_1(%arg0: i32) -> (i32, i32) {
    %c0_i32 = arith.constant 0 : i32
    %c0_i32_0 = arith.constant 0 : i32
    %c0_i32_1 = arith.constant 0 : i32
    return %c0_i32, %c0_i32_0 : i32, i32
  }
  func.func @transform_2(%arg0: i32) -> (i32, i32) {
    %c0_i32 = arith.constant 0 : i32
    %c0_i32_0 = arith.constant 0 : i32
    return %arg0, %c0_i32 : i32, i32
  }
}

</mosaic_0001>

<llo_original>
// kernel: patch_embedding_2d.1
$region0: #{patch_embedding_2d.1}
  #allocation0 [shape = 'u32[]', space=smem, size = 0x4, offset = 0x4, fixed_abs, tag = 'smem constant byte address 0x4 - core index']
  #allocation1 [shape = 'u32[144,128]{1,0:T(1,128)}', space=vmem, size = 0x12000, scoped, tag = 'internal scratch']
  %s0 = inlined_call_operand.vmem [shape: f32[32,64], index: 0, kind: input, shape index: {}]
  %s1 = inlined_call_operand.vmem [shape: f32[64,128], index: 1, kind: input, shape index: {}]
  %s2 = inlined_call_operand.hbm [shape: f32[32,128], index: 2, kind: output, shape index: {}]
  %s3 = sld [smem:[#allocation0]]
  $region18: #{patch_embedding_2d.1} parent=0
    _
  %s5 = ssub.s32 1, %s3
  %s6 = scalar_select 0, %s5, %s3
  $region1: #{patch_embedding_2d.1} parent=0
    #allocation2 [shape = 'u8[16384]{0}', space=vmem, size = 0x4000, scoped, tag = 'output window, operand 0, single buffered']
    #allocation3 [shape = 's32[1]{0}', space=sflag, size = 0x4, scoped, tag = 'scoped memory for patch_embedding_2d.1']
    %7 = vsyncpa [#allocation3], 0
    // Predicated region
    $region2: #{patch_embedding_2d.1} parent=1 // pred_check
      _
    $region3: #{patch_embedding_2d.1} parent=1 // pred_check_branch
      %9 = sbr.rel (0) target = $region5
    $region4: #{patch_embedding_2d.1} parent=1 // pred_region
      _
    $region5: #{patch_embedding_2d.1} parent=1 // pred_fallthru
      _
    // Predicated region
    $region6: #{patch_embedding_2d.1} parent=1 // pred_check
      _
    $region7: #{patch_embedding_2d.1} parent=1 // pred_check_branch
      %11 = sbr.rel (0) target = $region9
    $region8: #{patch_embedding_2d.1} parent=1 // pred_region
      _
    $region9: #{patch_embedding_2d.1} parent=1 // pred_fallthru
      _
    %v12 = vld [vmem:[%s0] sm:$0xff]
    %v13 = vld [vmem:[%s0 + $0x8] sm:$0xff]
    %v14 = vld [vmem:[%s0 + $0x10] sm:$0xff]
    %v15 = vld [vmem:[%s0 + $0x18] sm:$0xff]
    %v16 = vld [vmem:[%s1] sm:$0xff]
    %v17 = vld [vmem:[%s1 + $0x8] sm:$0xff]
    %v18 = vld [vmem:[%s1 + $0x10] sm:$0xff]
    %v19 = vld [vmem:[%s1 + $0x18] sm:$0xff]
    %v20 = vld [vmem:[%s1 + $0x20] sm:$0xff]
    %v21 = vld [vmem:[%s1 + $0x28] sm:$0xff]
    %v22 = vld [vmem:[%s1 + $0x30] sm:$0xff]
    %v23 = vld [vmem:[%s1 + $0x38] sm:$0xff]
    %vm24 = vcmask 523264
    %v26 = vsel %vm24, %v12, 0
    %v29 = vsel %vm24, %v13, 0
    %v32 = vsel %vm24, %v14, 0
    %v35 = vsel %vm24, %v15, 0
    %37 = vmatprep.subr.mxu0 0.0
    %38 = vmatpush1.msra.mxu0 %v16
    %39 = vmatprep.subr.mxu0 0.0
    %40 = vmatpush1.msra.mxu0 %v17
    %41 = vmatprep.subr.mxu0 0.0
    %42 = vmatpush1.msra.mxu0 %v18
    %43 = vmatprep.subr.mxu0 0.0
    %44 = vmatpush1.msra.mxu0 %v19
    %45 = vmatprep.subr.mxu0 0.0
    %46 = vmatpush1.msra.mxu0 %v20
    %47 = vmatprep.subr.mxu0 0.0
    %48 = vmatpush1.msra.mxu0 %v21
    %49 = vmatprep.subr.mxu0 0.0
    %50 = vmatpush1.msra.mxu0 %v22
    %51 = vmatprep.subr.mxu0 0.0
    %52 = vmatpush1.msra.mxu0 %v23
    %53 = vmatprep.subr.mxu0 0.0
    %54 = vmatpush1.msra.mxu0 0.0
    %55 = vmatprep.subr.mxu0 0.0
    %56 = vmatpush1.msra.mxu0 0.0
    %57 = vmatprep.subr.mxu0 0.0
    %58 = vmatpush1.msra.mxu0 0.0
    %59 = vmatprep.subr.mxu0 0.0
    %60 = vmatpush1.msra.mxu0 0.0
    %61 = vmatprep.subr.mxu0 0.0
    %62 = vmatpush1.msra.mxu0 0.0
    %63 = vmatprep.subr.mxu0 0.0
    %64 = vmatpush1.msra.mxu0 0.0
    %65 = vmatprep.subr.mxu0 0.0
    %66 = vmatpush1.msra.mxu0 0.0
    %67 = vmatprep.subr.mxu0 0.0
    %68 = vmatpush1.msra.mxu0 0.0
    %69 = vmatprep.subr.mxu0 0.0
    %70 = vmatpush1.msra.mxu0 0.0
    %71 = vmatprep.subr.mxu0 0.0
    %72 = vmatpush1.msra.mxu0 0.0
    %73 = vmatprep.subr.mxu0 0.0
    %74 = vmatpush1.msra.mxu0 0.0
    %75 = vmatprep.subr.mxu0 0.0
    %76 = vmatpush1.msra.mxu0 0.0
    %77 = vmatprep.subr.mxu0 0.0
    %78 = vmatpush1.msra.mxu0 0.0
    %79 = vmatprep.subr.mxu0 0.0
    %80 = vmatpush1.msra.mxu0 0.0
    %81 = vmatprep.subr.mxu0 0.0
    %82 = vmatpush1.msra.mxu0 0.0
    %83 = vmatprep.subr.mxu0 0.0
    %84 = vmatpush1.msra.mxu0 0.0
    %85 = vmatprep.subr.mxu0 0.0
    %86 = vmatpush1.msra.mxu0 0.0
    %87 = vmatprep.subr.mxu0 0.0
    %88 = vmatpush1.msra.mxu0 0.0
    %89 = vmatprep.subr.mxu0 0.0
    %90 = vmatpush1.msra.mxu0 0.0
    %91 = vmatprep.subr.mxu0 0.0
    %92 = vmatpush1.msra.mxu0 0.0
    %93 = vmatprep.subr.mxu0 0.0
    %94 = vmatpush1.msra.mxu0 0.0
    %95 = vmatprep.subr.mxu0 0.0
    %96 = vmatpush1.msra.mxu0 0.0
    %97 = vmatprep.subr.mxu0 0.0
    %98 = vmatpush1.msra.mxu0 0.0
    %99 = vmatprep.subr.mxu0 0.0
    %100 = vmatpush1.msra.mxu0 0.0
    %101 = vmatprep.mubr.f32.mxu0 0.0
    %102 = vmatmul.mubr.f32.gmra.mrb[0].mxu0 %v26
    %v103 = vpop.f32.mrb[0].mxu0
    %v104 = vadd.f32 0.0, %v103
    %v105 = vpop.f32.mrb[0].mxu0
    %106 = vmatprep.mubr.f32.mxu0 0.0
    %107 = vmatmul.mubr.f32.gmra.mrb[0].mxu0 %v29
    %v108 = vpop.f32.mrb[0].mxu0
    %v109 = vadd.f32 0.0, %v108
    %v110 = vpop.f32.mrb[0].mxu0
    %111 = vmatprep.mubr.f32.mxu0 0.0
    %112 = vmatmul.mubr.f32.gmra.mrb[0].mxu0 %v32
    %v113 = vpop.f32.mrb[0].mxu0
    %v114 = vadd.f32 0.0, %v113
    %v115 = vpop.f32.mrb[0].mxu0
    %116 = vmatprep.mubr.f32.mxu0 0.0
    %117 = vmatmul.mubr.f32.gmra.mrb[0].mxu0 %v35
    %v118 = vpop.f32.mrb[0].mxu0
    %v119 = vadd.f32 0.0, %v118
    %v120 = vpop.f32.mrb[0].mxu0
    %121 = vdwg.mxu0
    %122 = vst [vmem:[#allocation2] sm:$0xff] %v104
    %123 = vst [vmem:[#allocation2 + $0x8] sm:$0xff] %v109
    %124 = vst [vmem:[#allocation2 + $0x10] sm:$0xff] %v114
    %125 = vst [vmem:[#allocation2 + $0x18] sm:$0xff] %v119
    // Predicated region
    $region10: #{patch_embedding_2d.1} parent=1 // pred_check
      _
    $region11: #{patch_embedding_2d.1} parent=1 // pred_check_branch
      %127 = sbr.rel (0) target = $region13
    $region12: #{patch_embedding_2d.1} parent=1 // pred_region
      %s129 = ssub.s32 512, 512
      %130 = vsyncadd [#allocation3], %s129
      %s131 = sshll.u32 [#allocation2], 4
      %s132 = int_to_ptr.vmem [resolvable:$true] %s131
      %137 = dma.vmem_to_hbm [thread:$0]  %s132, 512, %s2, [#allocation3], 128, 128, 8
    $region13: #{patch_embedding_2d.1} parent=1 // pred_fallthru
      _
    // Predicated region
    $region14: #{patch_embedding_2d.1} parent=1 // pred_check
      _
    $region15: #{patch_embedding_2d.1} parent=1 // pred_check_branch
      %139 = sbr.rel (0) target = $region17
    $region16: #{patch_embedding_2d.1} parent=1 // pred_region
      %140 = dma.done [#allocation3], 512
    $region17: #{patch_embedding_2d.1} parent=1 // pred_fallthru
      _
    %141 = vsyncpa [#allocation3], 1

</llo_original>
